<compile_context>
chip_gen: v7x
topology: tpu7x:2x2x1
jax: 0.10.0
libtpu: 0.0.40
codegen_flags: <defaults>
</compile_context>

<pallas_src>
import functools
import math

import jax
import jax.numpy as jnp
from jax.experimental import pallas as pl
from jax.experimental.pallas import tpu as pltpu


def _round_up(x, m):
    return (x + m - 1) // m * m


def _mfm_fused_kernel(x_ref, w_ref, b_ref, out_ref, *, cp):
    # x_ref  : (tm, K)      activation tile (compute dtype), K = full contraction
    # w_ref  : (K, 2*cp)    [W_a | W_b] concatenated along lanes, channel-padded
    # b_ref  : (1, 2*cp)    [b_a | b_b] in f32
    # out_ref: (tm, cp)     lane-dense output tile
    y = jnp.dot(x_ref[...], w_ref[...], preferred_element_type=jnp.float32)
    y = y + b_ref[...]
    # MFM: elementwise max of the two halves.  cp is a multiple of 128, so this
    # is a lane-aligned static slice followed by a pure-VPU maximum (no XLU).
    out_ref[...] = jnp.maximum(y[:, :cp], y[:, cp:]).astype(out_ref.dtype)


def _mfm_matmul(features, w2d, bias, cout, *, tm=512,
                compute_dtype=jnp.bfloat16, out_dtype=None,
                vmem_cap_bytes=40 << 20):
    """Core MFM: max(features @ W_a + b_a, features @ W_b + b_b).

    features: (M, K) ; w2d: (K, 2*cout) ; bias: (2*cout,) or None -> (M, cout)
    """
    M, K = features.shape
    if out_dtype is None:
        out_dtype = features.dtype
    if bias is None:
        bias = jnp.zeros((2 * cout,), jnp.float32)

    Cp = _round_up(cout, 128)

    # Concatenated, channel-padded weight [W_a | W_b] and bias (tiny arrays).
    wa = w2d[:, :cout].astype(compute_dtype)
    wb = w2d[:, cout:].astype(compute_dtype)
    w_cat = jnp.zeros((K, 2 * Cp), compute_dtype)
    w_cat = w_cat.at[:, :cout].set(wa).at[:, Cp:Cp + cout].set(wb)
    b_cat = jnp.zeros((1, 2 * Cp), jnp.float32)
    b_cat = b_cat.at[0, :cout].set(bias[:cout].astype(jnp.float32))
    b_cat = b_cat.at[0, Cp:Cp + cout].set(bias[cout:].astype(jnp.float32))

    x = features.astype(compute_dtype)
    x_bytes = jnp.dtype(compute_dtype).itemsize
    out_bytes = jnp.dtype(out_dtype).itemsize

    # --- choose the M tile ---------------------------------------------------
    tm = max(8, _round_up(min(tm, max(M, 1)), 8))
    # v7x has 2 TensorCores per chip: prefer >= 2 grid blocks when M allows.
    if M > 8 and pl.cdiv(M, tm) < 2:
        tm = max(8, _round_up(pl.cdiv(M, 2), 8))

    def _footprint(t):
        return (2 * t * K * x_bytes            # activation tile, double-buffered
                + 2 * K * (2 * Cp) * x_bytes   # weights (grid-invariant)
                + 2 * (2 * Cp) * 4             # bias
                + 2 * t * Cp * out_bytes)      # output tile, double-buffered

    # Shrink tm until the pipelined footprint fits a v7x/v5e-safe VMEM budget.
    while tm > 8 and _footprint(tm) > vmem_cap_bytes:
        tm = max(8, _round_up(tm // 2, 8))

    grid_m = pl.cdiv(M, tm)
    vmem_limit = int(min(max(_footprint(tm) + (8 << 20), 32 << 20), 100 << 20))

    kernel = functools.partial(_mfm_fused_kernel, cp=Cp)
    out = pl.pallas_call(
        kernel,
        out_shape=jax.ShapeDtypeStruct((M, Cp), out_dtype),
        grid_spec=pltpu.PrefetchScalarGridSpec(
            num_scalar_prefetch=0,
            grid=(grid_m,),
            in_specs=[
                pl.BlockSpec((tm, K), lambda i: (i, 0)),        # full-extent K, no pad
                pl.BlockSpec((K, 2 * Cp), lambda i: (0, 0)),    # fused weight
                pl.BlockSpec((1, 2 * Cp), lambda i: (0, 0)),    # fused bias
            ],
            out_specs=pl.BlockSpec((tm, Cp), lambda i: (i, 0)),
        ),
        compiler_params=pltpu.CompilerParams(
            dimension_semantics=("parallel",),
            vmem_limit_bytes=vmem_limit),
    )(x, w_cat, b_cat)

    # Trailing partial M block and the Cout->Cp lane pad are sliced off here.
    return out[:, :cout]


def mfm_conv(x_nchw, weight_oihw, bias, *, stride=1, padding=1, tm=512,
             compute_dtype=jnp.bfloat16):
    """mfm forward, conv variant (type=1). x_nchw: (N, Cin, H, W)."""
    N, Cin, H, W = x_nchw.shape
    two_cout, _, kh_sz, kw_sz = weight_oihw.shape
    cout = two_cout // 2
    H_out = (H + 2 * padding - kh_sz) // stride + 1
    W_out = (W + 2 * padding - kw_sz) // stride + 1

    # NCHW -> NHWC (lane-dense channels); cast to the compute dtype before the
    # im2col so the materialized patch matrix costs half the HBM bytes.
    x_nhwc = jnp.transpose(x_nchw, (0, 2, 3, 1)).astype(compute_dtype)
    x_pad = jnp.pad(
        x_nhwc, ((0, 0), (padding, padding), (padding, padding), (0, 0)))

    # im2col in the wrapper (XLA), inner K ordering (kh, kw, cin) to match the
    # OIHW -> (kh, kw, cin, o) weight reshape below.
    taps = []
    for kh in range(kh_sz):
        for kw in range(kw_sz):
            taps.append(
                x_pad[:, kh: kh + (H_out - 1) * stride + 1: stride,
                      kw: kw + (W_out - 1) * stride + 1: stride, :])
    patches = jnp.concatenate(taps, axis=-1)
    M = N * H_out * W_out
    K = kh_sz * kw_sz * Cin
    patches2d = patches.reshape(M, K)

    # OIHW -> (kh, kw, cin, o) -> (K, 2*cout)
    w2d = jnp.transpose(weight_oihw, (2, 3, 1, 0)).reshape(K, two_cout)

    out2d = _mfm_matmul(patches2d, w2d, bias, cout, tm=tm,
                        compute_dtype=compute_dtype, out_dtype=x_nchw.dtype)
    out = out2d.reshape(N, H_out, W_out, cout)
    # NOTE: if the surrounding model can run NHWC, both layout transposes in
    # this wrapper can be dropped (pure HBM-shuffle overhead).
    return jnp.transpose(out, (0, 3, 1, 2))


def mfm_linear(x, weight, bias, *, tm=512, compute_dtype=jnp.bfloat16):
    """mfm forward, linear variant (type=2). x: (N, in_features)."""
    two_cout = weight.shape[0]
    cout = two_cout // 2
    return _mfm_matmul(x, weight.T, bias, cout, tm=tm,
                       compute_dtype=compute_dtype, out_dtype=x.dtype)


# ----------------------------- references -----------------------------------

def _reference_mfm_conv(x_nchw, weight_oihw, bias, *, stride=1, padding=1):
    y = jax.lax.conv_general_dilated(
        x_nchw, weight_oihw,
        window_strides=(stride, stride),
        padding=((padding, padding), (padding, padding)),
        dimension_numbers=("NCHW", "OIHW", "NCHW"))
    y = y + bias[None, :, None, None]
    cout = weight_oihw.shape[0] // 2
    return jnp.maximum(y[:, :cout], y[:, cout:])


def _reference_mfm_linear(x, weight, bias):
    y = x @ weight.T + bias
    cout = weight.shape[0] // 2
    return jnp.maximum(y[:, :cout], y[:, cout:])


if __name__ == "__main__":
    key = jax.random.PRNGKey(0)
    kx, kw, kb, kx2, kw2, kb2 = jax.random.split(key, 6)

    # ---- conv variant (type=1): k=3, s=1, p=1 ----
    N, Cin, H, W = 2, 4, 16, 16
    Cout = 8
    fan_in = Cin * 3 * 3
    bound = 1.0 / math.sqrt(fan_in)
    x = jax.random.normal(kx, (N, Cin, H, W), dtype=jnp.float32)
    weight = jax.random.uniform(kw, (2 * Cout, Cin, 3, 3),
                                minval=-bound, maxval=bound, dtype=jnp.float32)
    bias = jax.random.uniform(kb, (2 * Cout,),
                              minval=-bound, maxval=bound, dtype=jnp.float32)

    out = jax.block_until_ready(mfm_conv(x, weight, bias))
    ref = jax.block_until_ready(_reference_mfm_conv(x, weight, bias))
    assert out.shape == (N, Cout, H, W)
    err = float(jnp.max(jnp.abs(out - ref)))
    assert err < 3e-2, f"conv mismatch: {err}"   # bf16-operand tolerance

    # ---- linear variant (type=2) ----
    Nl, Fin, Fout = 8, 32, 8
    bound_l = 1.0 / math.sqrt(Fin)
    xl = jax.random.normal(kx2, (Nl, Fin), dtype=jnp.float32)
    wl = jax.random.uniform(kw2, (2 * Fout, Fin),
                            minval=-bound_l, maxval=bound_l, dtype=jnp.float32)
    bl = jax.random.uniform(kb2, (2 * Fout,),
                            minval=-bound_l, maxval=bound_l, dtype=jnp.float32)

    outl = jax.block_until_ready(mfm_linear(xl, wl, bl))
    refl = jax.block_until_ready(_reference_mfm_linear(xl, wl, bl))
    assert outl.shape == (Nl, Fout)
    errl = float(jnp.max(jnp.abs(outl - refl)))
    assert errl < 3e-2, f"linear mismatch: {errl}"

    print("KERNEL_OK")
</pallas_src>

<mosaic_0001>
module attributes {stable_mosaic.version = 11 : i64} {
  func.func @_mfm_fused_kernel(%arg0: i32, %arg1: memref<256x36xbf16, #tpu.memory_space<vmem>>, %arg2: memref<36x256xbf16, #tpu.memory_space<vmem>>, %arg3: memref<1x256xf32, #tpu.memory_space<vmem>>, %arg4: memref<256x128xf32, #tpu.memory_space<vmem>>) attributes {dimension_semantics = [#tpu.dimension_semantics<parallel>], iteration_bounds = array<i64: 2>, scalar_prefetch = 0 : i64, scratch_operands = 0 : i64, tpu.core_type = #tpu.core_type<tc>, window_params = [{transform_indices = @transform_0, window_bounds = array<i64: 256, 36>}, {pipeline_mode = #tpu.pipeline_mode<synchronous>, transform_indices = @transform_1, window_bounds = array<i64: 36, 256>}, {pipeline_mode = #tpu.pipeline_mode<synchronous>, transform_indices = @transform_2, window_bounds = array<i64: 1, 256>}, {transform_indices = @transform_3, window_bounds = array<i64: 256, 128>}]} {
    %c0 = arith.constant 0 : index
    %c0_0 = arith.constant 0 : index
    %0 = vector.load %arg1[%c0, %c0_0] : memref<256x36xbf16, #tpu.memory_space<vmem>>, vector<256x36xbf16>
    %c0_1 = arith.constant 0 : index
    %c0_2 = arith.constant 0 : index
    %1 = vector.load %arg2[%c0_1, %c0_2] : memref<36x256xbf16, #tpu.memory_space<vmem>>, vector<36x256xbf16>
    %cst = arith.constant dense<0.000000e+00> : vector<256x256xf32>
    %2 = tpu.matmul %0, %1, %cst {dimension_numbers = #tpu.dot_dimension_numbers<[1], [0], [0], [1], [0, 0, 1, 1], [], []>} : vector<256x36xbf16>, vector<36x256xbf16>, vector<256x256xf32> -> vector<256x256xf32>
    %c0_3 = arith.constant 0 : index
    %c0_4 = arith.constant 0 : index
    %3 = vector.load %arg3[%c0_3, %c0_4] : memref<1x256xf32, #tpu.memory_space<vmem>>, vector<1x256xf32>
    %4 = vector.broadcast %3 : vector<1x256xf32> to vector<256x256xf32>
    %5 = arith.addf %2, %4 : vector<256x256xf32>
    %6 = vector.extract_strided_slice %5 {offsets = [0, 0], sizes = [256, 128], strides = [1, 1]} : vector<256x256xf32> to vector<256x128xf32>
    %7 = vector.extract_strided_slice %5 {offsets = [0, 128], sizes = [256, 128], strides = [1, 1]} : vector<256x256xf32> to vector<256x128xf32>
    %8 = arith.maximumf %6, %7 : vector<256x128xf32>
    %c0_5 = arith.constant 0 : index
    %c0_6 = arith.constant 0 : index
    %9 = vector.load %arg4[%c0_5, %c0_6] : memref<256x128xf32, #tpu.memory_space<vmem>>, vector<256x128xf32>
    tpu.vector_store %arg4[%c0_5, %c0_6], %8 {strides = array<i32>} : memref<256x128xf32, #tpu.memory_space<vmem>>, vector<256x128xf32>,
    return
  }
  func.func @transform_0(%arg0: i32) -> (i32, i32) {
    %c0_i32 = arith.constant 0 : i32
    %c0_i32_0 = arith.constant 0 : i32
    return %arg0, %c0_i32 : i32, i32
  }
  func.func @transform_1(%arg0: i32) -> (i32, i32) {
    %c0_i32 = arith.constant 0 : i32
    %c0_i32_0 = arith.constant 0 : i32
    %c0_i32_1 = arith.constant 0 : i32
    return %c0_i32, %c0_i32_0 : i32, i32
  }
  func.func @transform_2(%arg0: i32) -> (i32, i32) {
    %c0_i32 = arith.constant 0 : i32
    %c0_i32_0 = arith.constant 0 : i32
    %c0_i32_1 = arith.constant 0 : i32
    return %c0_i32, %c0_i32_0 : i32, i32
  }
  func.func @transform_3(%arg0: i32) -> (i32, i32) {
    %c0_i32 = arith.constant 0 : i32
    %c0_i32_0 = arith.constant 0 : i32
    return %arg0, %c0_i32 : i32, i32
  }
}

</mosaic_0001>

<llo_original>
// kernel: tpu_custom_call.1
$region0: #{tpu_custom_call.1}
  #allocation0 [shape = 'u32[]', space=smem, size = 0x4, offset = 0x4, fixed_abs, tag = 'smem constant byte address 0x4 - core index']
  #allocation1 [shape = 'u32[144,128]{1,0:T(1,128)}', space=vmem, size = 0x12000, scoped, tag = 'internal scratch']
  %s0 = inlined_call_operand.vmem [shape: bf16[512,36], index: 0, kind: input, shape index: {}]
  %s1 = inlined_call_operand.vmem [shape: bf16[36,256], index: 1, kind: input, shape index: {}]
  %s2 = inlined_call_operand.vmem [shape: f32[1,256], index: 2, kind: input, shape index: {}]
  %s3 = inlined_call_operand.hbm [shape: f32[512,128], index: 3, kind: output, shape index: {}]
  %s4 = sld [smem:[#allocation0]]
  $region45: #{tpu_custom_call.1} parent=0
    _
  %s6 = ssub.s32 1, %s4
  %s7 = scalar_select 0, %s6, %s4
  $region1: #{tpu_custom_call.1} parent=0
    #allocation2 [shape = 'u8[262144]{0}', space=vmem, size = 0x40000, scoped, tag = 'output window, operand 0']
    #allocation3 [shape = 's32[2]{0}', space=sflag, size = 0x8, scoped, tag = 'scoped memory for tpu_custom_call.1']
    %8 = vsyncpa [#allocation3], 0
    %s9 = scalar_lea.sflag [#allocation3], 1
    %10 = vsyncpa %s9, 0
    loop: start=0, step=1, limit=4
    $region2: #{tpu_custom_call.1} parent=1 // loop_pre_header
      _
    $region3: #{tpu_custom_call.1} parent=1 // loop_header
      %s12 = sphi 0, %s16
      %p13 = scmp.ge.s32.totalorder %s12, 4
      %s22 = sphi 0, %s24
      %s25 = sphi 0, %s22
      %s26 = sphi 0, %s25
      %s42 = sphi 0, %s26
      %s46 = sphi 0, %s46
      %s48 = sphi 0, %s46
      %s49 = sphi 0, %s48
      %s63 = sphi 0, %s49
      %s67 = sphi 0, %s67
      %s69 = sphi 0, %s67
      %s70 = sphi 0, %s69
      %s84 = sphi 0, %s70
      %s90 = sphi 0, %s92
      %s93 = sphi 0, %s90
      %s94 = sphi 0, %s93
      %s110 = sphi 0, %s94
    $region4: #{tpu_custom_call.1} parent=1 // loop_header_branch
      %15 = sbr.rel (%p13) target = $region8
    $region5: #{tpu_custom_call.1} parent=1 // loop_body
      %s17 = ssub.s32 %s12, 1
      %s18 = ssub.s32 %s12, 2
      %s19 = sadd.s32 %s12, 1
      %s20 = ssub.s32 %s12, %s19
      %p21 = scmp.eq.s32.totalorder %s20, 0
      %s23 = sadd.s32 %s22, 1
      %s24 = scalar_select %p21, %s22, %s23
      %p27 = pneg %p21
      %p28 = scmp.eq.s32.totalorder %s12, 1
      %p29 = por %p27, %p28
      %p30 = scmp.ne.s32.totalorder %s22, %s25
      %p31 = scmp.eq.s32.totalorder %s12, 0
      %p32 = por %p30, %p31
      %p33 = scmp.ne.s32.totalorder %s22, %s25
      %p34 = scmp.eq.s32.totalorder %s17, 1
      %p35 = por %p33, %p34
      %p36 = scmp.ne.s32.totalorder %s25, %s26
      %p37 = scmp.eq.s32.totalorder %s17, 0
      %p38 = por %p36, %p37
      %p39 = scmp.ne.s32.totalorder %s25, %s26
      %p40 = scmp.eq.s32.totalorder %s18, 1
      %p41 = por %p39, %p40
      %p43 = scmp.ne.s32.totalorder %s26, %s42
      %p44 = scmp.eq.s32.totalorder %s18, 0
      %p45 = por %p43, %p44
      %s47 = sadd.s32 %s46, 1
      %p50 = scmp.eq.s32.totalorder %s12, 1
      %p51 = scmp.ne.s32.totalorder %s46, %s48
      %p52 = scmp.eq.s32.totalorder %s12, 0
      %p53 = por %p51, %p52
      %p54 = scmp.ne.s32.totalorder %s46, %s48
      %p55 = scmp.eq.s32.totalorder %s17, 1
      %p56 = por %p54, %p55
      %p57 = scmp.ne.s32.totalorder %s48, %s49
      %p58 = scmp.eq.s32.totalorder %s17, 0
      %p59 = por %p57, %p58
      %p60 = scmp.ne.s32.totalorder %s48, %s49
      %p61 = scmp.eq.s32.totalorder %s18, 1
      %p62 = por %p60, %p61
      %p64 = scmp.ne.s32.totalorder %s49, %s63
      %p65 = scmp.eq.s32.totalorder %s18, 0
      %p66 = por %p64, %p65
      %s68 = sadd.s32 %s67, 1
      %p71 = scmp.eq.s32.totalorder %s12, 1
      %p72 = scmp.ne.s32.totalorder %s67, %s69
      %p73 = scmp.eq.s32.totalorder %s12, 0
      %p74 = por %p72, %p73
      %p75 = scmp.ne.s32.totalorder %s67, %s69
      %p76 = scmp.eq.s32.totalorder %s17, 1
      %p77 = por %p75, %p76
      %p78 = scmp.ne.s32.totalorder %s69, %s70
      %p79 = scmp.eq.s32.totalorder %s17, 0
      %p80 = por %p78, %p79
      %p81 = scmp.ne.s32.totalorder %s69, %s70
      %p82 = scmp.eq.s32.totalorder %s18, 1
      %p83 = por %p81, %p82
      %p85 = scmp.ne.s32.totalorder %s70, %s84
      %p86 = scmp.eq.s32.totalorder %s18, 0
      %p87 = por %p85, %p86
      %s88 = ssub.s32 %s12, %s19
      %p89 = scmp.eq.s32.totalorder %s88, 0
      %s91 = sadd.s32 %s90, 1
      %s92 = scalar_select %p89, %s90, %s91
      %p95 = pneg %p89
      %p96 = scmp.eq.s32.totalorder %s12, 1
      %p97 = por %p95, %p96
      %p98 = scmp.ne.s32.totalorder %s90, %s93
      %p99 = scmp.eq.s32.totalorder %s12, 0
      %p100 = por %p98, %p99
      %p101 = scmp.ne.s32.totalorder %s90, %s93
      %p102 = scmp.eq.s32.totalorder %s17, 1
      %p103 = por %p101, %p102
      %p104 = scmp.ne.s32.totalorder %s93, %s94
      %p105 = scmp.eq.s32.totalorder %s17, 0
      %p106 = por %p104, %p105
      %p107 = scmp.ne.s32.totalorder %s93, %s94
      %p108 = scmp.eq.s32.totalorder %s18, 1
      %p109 = por %p107, %p108
      %p111 = scmp.ne.s32.totalorder %s94, %s110
      %p112 = scmp.eq.s32.totalorder %s18, 0
      %p113 = por %p111, %p112
      %p114 = scmp.le.s32.totalorder 1, %s12
      %p115 = scmp.lt.s32.totalorder %s12, 3
      %p116 = pnand %p114, %p115
      %p117 = pneg %p116
      // Predicated region
      $region9: #{tpu_custom_call.1} parent=5 // pred_check
        _
      $region10: #{tpu_custom_call.1} parent=5 // pred_check_branch
        %119 = sbr.rel (%p116) target = $region12
      $region11: #{tpu_custom_call.1} parent=5 // pred_region
        %s120 = ssub.s32 %s12, 1
        // Predicated region
        $region13: #{tpu_custom_call.1} parent=11 // pred_check
          %p121 = pneg %p59
        $region14: #{tpu_custom_call.1} parent=11 // pred_check_branch
          %123 = sbr.rel (%p121) target = $region16
        $region15: #{tpu_custom_call.1} parent=11 // pred_region
          _
        $region16: #{tpu_custom_call.1} parent=11 // pred_fallthru
          _
        // Predicated region
        $region17: #{tpu_custom_call.1} parent=11 // pred_check
          %p124 = pneg %p80
        $region18: #{tpu_custom_call.1} parent=11 // pred_check_branch
          %126 = sbr.rel (%p124) target = $region20
        $region19: #{tpu_custom_call.1} parent=11 // pred_region
          _
        $region20: #{tpu_custom_call.1} parent=11 // pred_fallthru
          _
      $region12: #{tpu_custom_call.1} parent=5 // pred_fallthru
        _
      %p127 = scmp.lt.s32.totalorder %s12, 2
      // Predicated region
      $region21: #{tpu_custom_call.1} parent=5 // pred_check
        %p128 = pneg %p127
      $region22: #{tpu_custom_call.1} parent=5 // pred_check_branch
        %130 = sbr.rel (%p128) target = $region24
      $region23: #{tpu_custom_call.1} parent=5 // pred_region
        // Predicated region
        $region25: #{tpu_custom_call.1} parent=23 // pred_check
          %p131 = pneg %p32
        $region26: #{tpu_custom_call.1} parent=23 // pred_check_branch
          %133 = sbr.rel (%p131) target = $region28
        $region27: #{tpu_custom_call.1} parent=23 // pred_region
          %s134 = smul.u32 32, %s12
          %p135 = scmp.lt.s32.totalorder %s134, 63
          %s136 = scalar_select %p135, %s134, 63
          %s137 = smul.addr %s136, 4
          %s138 = scalar_lea.vmem %s0, %s137
          %s139 = smul.u32 32, %s12
        $region28: #{tpu_custom_call.1} parent=23 // pred_fallthru
          _
      $region24: #{tpu_custom_call.1} parent=5 // pred_fallthru
        _
      %p140 = scmp.le.s32.totalorder 1, %s12
      %p141 = scmp.lt.s32.totalorder %s12, 3
      %p142 = pnand %p140, %p141
      %p143 = pneg %p142
      // Predicated region
      $region29: #{tpu_custom_call.1} parent=5 // pred_check
        _
      $region30: #{tpu_custom_call.1} parent=5 // pred_check_branch
        %145 = sbr.rel (%p142) target = $region32
      $region31: #{tpu_custom_call.1} parent=5 // pred_region
        %s146 = ssub.s32 %s12, 1
        %s147 = smul.u32 32, %s17
        %p148 = scmp.lt.s32.totalorder %s147, 63
        %s149 = scalar_select %p148, %s147, 63
        %s150 = smul.addr %s149, 4
        %s151 = scalar_lea.vmem %s0, %s150
        %p152 = pneg %p38
        %p153 = pneg %p35
        %p154 = pneg %p59
        %p155 = pneg %p56
        %p156 = pneg %p80
        %p157 = pneg %p77
        %p158 = pneg %p106
        %p159 = pneg %p103
        %s160 = sand.u32 %s93, 1
        %s161 = scalar_lea.sflag [#allocation3], %s160
        %s162 = sand.u32 %s93, 1
        %s163 = smul.addr %s162, 256
        %s164 = scalar_lea.vmem [#allocation2], %s163
        %s165 = smul.u32 32, %s17
        %p166 = scmp.lt.s32.totalorder %s165, 63
        %s167 = scalar_select %p166, %s165, 63
        %s168 = smul.addr %s167, 4
        %s169 = scalar_lea.vmem %s0, %s168
        %s170 = smul.u32 32, %s17
        %s171 = smul.u32 32, %s17
        %v173 = vld [vmem:[%s169] sm:$0xf]
        %v174 = vld [vmem:[%s169 + $0x4] sm:$0xf]
        %v175 = vld [vmem:[%s169 + $0x8] sm:$0xf]
        %v176 = vld [vmem:[%s169 + $0xc] sm:$0xf]
        %v177 = vld [vmem:[%s169 + $0x10] sm:$0xf]
        %v178 = vld [vmem:[%s169 + $0x14] sm:$0xf]
        %v179 = vld [vmem:[%s169 + $0x18] sm:$0xf]
        %v180 = vld [vmem:[%s169 + $0x1c] sm:$0xf]
        %v181 = vld [vmem:[%s169 + $0x20] sm:$0xf]
        %v182 = vld [vmem:[%s169 + $0x24] sm:$0xf]
        %v183 = vld [vmem:[%s169 + $0x28] sm:$0xf]
        %v184 = vld [vmem:[%s169 + $0x2c] sm:$0xf]
        %v185 = vld [vmem:[%s169 + $0x30] sm:$0xf]
        %v186 = vld [vmem:[%s169 + $0x34] sm:$0xf]
        %v187 = vld [vmem:[%s169 + $0x38] sm:$0xf]
        %v188 = vld [vmem:[%s169 + $0x3c] sm:$0xf]
        %v189 = vld [vmem:[%s169 + $0x40] sm:$0xf]
        %v190 = vld [vmem:[%s169 + $0x44] sm:$0xf]
        %v191 = vld [vmem:[%s169 + $0x48] sm:$0xf]
        %v192 = vld [vmem:[%s169 + $0x4c] sm:$0xf]
        %v193 = vld [vmem:[%s169 + $0x50] sm:$0xf]
        %v194 = vld [vmem:[%s169 + $0x54] sm:$0xf]
        %v195 = vld [vmem:[%s169 + $0x58] sm:$0xf]
        %v196 = vld [vmem:[%s169 + $0x5c] sm:$0xf]
        %v197 = vld [vmem:[%s169 + $0x60] sm:$0xf]
        %v198 = vld [vmem:[%s169 + $0x64] sm:$0xf]
        %v199 = vld [vmem:[%s169 + $0x68] sm:$0xf]
        %v200 = vld [vmem:[%s169 + $0x6c] sm:$0xf]
        %v201 = vld [vmem:[%s169 + $0x70] sm:$0xf]
        %v202 = vld [vmem:[%s169 + $0x74] sm:$0xf]
        %v203 = vld [vmem:[%s169 + $0x78] sm:$0xf]
        %v204 = vld [vmem:[%s169 + $0x7c] sm:$0xf]
        %v205 = vld [vmem:[%s1] sm:$0xff]
        %v206 = vld [vmem:[%s1 + $0x8] sm:$0xff]
        %v207 = vld [vmem:[%s1 + $0x10] sm:$0xff]
        %v208 = vld [vmem:[%s1 + $0x18] sm:$0xff]
        %v209 = vld [vmem:[%s1 + $0x20] sm:$0x33]
        %v210 = vld [vmem:[%s2] sm:$0x3]
        %v212 = vlaneseq
        %v213 = vshrl.u32 %v212, 7
        %v214 = vsub.s32 0, %v213
        %v215 = vrot.slane %v210, %v214
        %v216 = vlaneseq
        %v217 = vshrl.u32 %v216, 7
        %v218 = vsub.s32 1, %v217
        %v219 = vrot.slane %v210, %v218
        %v254 = vunpack.c.l.b16 %v173
        %v255 = vunpack.c.l.b16 %v174
        %v256 = vunpack.c.l.b16 %v175
        %v257 = vunpack.c.l.b16 %v176
        %v258 = vunpack.c.l.b16 %v177
        %v259 = vunpack.c.l.b16 %v178
        %v260 = vunpack.c.l.b16 %v179
        %v261 = vunpack.c.l.b16 %v180
        %v262 = vunpack.c.l.b16 %v181
        %v263 = vunpack.c.l.b16 %v182
        %v264 = vunpack.c.l.b16 %v183
        %v265 = vunpack.c.l.b16 %v184
        %v266 = vunpack.c.l.b16 %v185
        %v267 = vunpack.c.l.b16 %v186
        %v268 = vunpack.c.l.b16 %v187
        %v269 = vunpack.c.l.b16 %v188
        %v270 = vunpack.c.l.b16 %v189
        %v271 = vunpack.c.l.b16 %v190
        %v272 = vunpack.c.l.b16 %v191
        %v273 = vunpack.c.l.b16 %v192
        %v274 = vunpack.c.l.b16 %v193
        %v275 = vunpack.c.l.b16 %v194
        %v276 = vunpack.c.l.b16 %v195
        %v277 = vunpack.c.l.b16 %v196
        %v278 = vunpack.c.l.b16 %v197
        %v279 = vunpack.c.l.b16 %v198
        %v280 = vunpack.c.l.b16 %v199
        %v281 = vunpack.c.l.b16 %v200
        %v282 = vunpack.c.l.b16 %v201
        %v283 = vunpack.c.l.b16 %v202
        %v284 = vunpack.c.l.b16 %v203
        %v285 = vunpack.c.l.b16 %v204
        %v286 = vpack.c.b16 %v255, %v254
        %v287 = vpack.c.b16 %v257, %v256
        %v288 = vpack.c.b16 %v259, %v258
        %v289 = vpack.c.b16 %v261, %v260
        %v290 = vpack.c.b16 %v263, %v262
        %v291 = vpack.c.b16 %v265, %v264
        %v292 = vpack.c.b16 %v267, %v266
        %v293 = vpack.c.b16 %v269, %v268
        %v294 = vpack.c.b16 %v271, %v270
        %v295 = vpack.c.b16 %v273, %v272
        %v296 = vpack.c.b16 %v275, %v274
        %v297 = vpack.c.b16 %v277, %v276
        %v298 = vpack.c.b16 %v279, %v278
        %v299 = vpack.c.b16 %v281, %v280
        %v300 = vpack.c.b16 %v283, %v282
        %v301 = vpack.c.b16 %v285, %v284
        %v307 = vunpack.c.l.b16 %v205
        %v308 = vunpack.c.h.b16 %v205
        %v309 = vunpack.c.l.b16 %v206
        %v310 = vunpack.c.h.b16 %v206
        %v311 = vunpack.c.l.b16 %v207
        %v312 = vunpack.c.h.b16 %v207
        %v313 = vunpack.c.l.b16 %v208
        %v314 = vunpack.c.h.b16 %v208
        %v315 = vunpack.c.l.b16 %v209
        %v316 = vunpack.c.h.b16 %v209
        %v317 = vpack.c.b16 %v309, %v307
        %v318 = vpack.c.b16 %v310, %v308
        %v319 = vpack.c.b16 %v313, %v311
        %v320 = vpack.c.b16 %v314, %v312
        %v321 = vpack.c.b16 %v315, %v315
        %v322 = vpack.c.b16 %v316, %v316
        %vm327 = vcmask 293888
        %v329 = vsel %vm327, %v286, 0
        %v332 = vsel %vm327, %v287, 0
        %v335 = vsel %vm327, %v288, 0
        %v338 = vsel %vm327, %v289, 0
        %v341 = vsel %vm327, %v290, 0
        %v344 = vsel %vm327, %v291, 0
        %v347 = vsel %vm327, %v292, 0
        %v350 = vsel %vm327, %v293, 0
        %v353 = vsel %vm327, %v294, 0
        %v356 = vsel %vm327, %v295, 0
        %v359 = vsel %vm327, %v296, 0
        %v362 = vsel %vm327, %v297, 0
        %v365 = vsel %vm327, %v298, 0
        %v368 = vsel %vm327, %v299, 0
        %v371 = vsel %vm327, %v300, 0
        %v374 = vsel %vm327, %v301, 0
        %vm376 = vcmask 1041408
        %v378 = vsel %vm376, %v321, 0
        %v381 = vsel %vm376, %v322, 0
        %383 = vmatprep.subr.bf16.mxu0 %v318
        %384 = vmatpush1.bf16.msra.mxu0 %v317
        %385 = vmatprep.subr.bf16.mxu0 %v320
        %386 = vmatpush1.bf16.msra.mxu0 %v319
        %387 = vmatprep.subr.bf16.mxu0 %v381
        %388 = vmatpush1.bf16.msra.mxu0 %v378
        %389 = vmatprep.subr.bf16.mxu0 0
        %390 = vmatpush1.bf16.msra.mxu0 0
        %391 = vmatprep.subr.bf16.mxu0 0
        %392 = vmatpush1.bf16.msra.mxu0 0
        %393 = vmatprep.subr.bf16.mxu0 0
        %394 = vmatpush1.bf16.msra.mxu0 0
        %395 = vmatprep.subr.bf16.mxu0 0
        %396 = vmatpush1.bf16.msra.mxu0 0
        %397 = vmatprep.subr.bf16.mxu0 0
        %398 = vmatpush1.bf16.msra.mxu0 0
        %399 = vmatprep.subr.bf16.mxu0 0
        %400 = vmatpush1.bf16.msra.mxu0 0
        %401 = vmatprep.subr.bf16.mxu0 0
        %402 = vmatpush1.bf16.msra.mxu0 0
        %403 = vmatprep.subr.bf16.mxu0 0
        %404 = vmatpush1.bf16.msra.mxu0 0
        %405 = vmatprep.subr.bf16.mxu0 0
        %406 = vmatpush1.bf16.msra.mxu0 0
        %407 = vmatprep.subr.bf16.mxu0 0
        %408 = vmatpush1.bf16.msra.mxu0 0
        %409 = vmatprep.subr.bf16.mxu0 0
        %410 = vmatpush1.bf16.msra.mxu0 0
        %411 = vmatprep.subr.bf16.mxu0 0
        %412 = vmatpush1.bf16.msra.mxu0 0
        %413 = vmatprep.subr.bf16.mxu0 0
        %414 = vmatpush1.bf16.msra.mxu0 0
        %415 = vmatprep.mubr.bf16.mxu0 0
        %416 = vmatmul.mubr.bf16.gmra.mrb[0].mxu0 %v329
        %v417 = vpop.f32.mrb[0].mxu0
        %v418 = vadd.f32 %v215, %v417
        %v419 = vpop.f32.mrb[0].mxu0
        %v420 = vadd.f32 %v219, %v419
        %v421 = vpop.f32.mrb[0].mxu0
        %v422 = vadd.f32 %v215, %v421
        %v423 = vpop.f32.mrb[0].mxu0
        %v424 = vadd.f32 %v219, %v423
        %425 = vmatprep.mubr.bf16.mxu0 0
        %426 = vmatmul.mubr.bf16.gmra.mrb[0].mxu0 %v332
        %v427 = vpop.f32.mrb[0].mxu0
        %v428 = vadd.f32 %v215, %v427
        %v429 = vpop.f32.mrb[0].mxu0
        %v430 = vadd.f32 %v219, %v429
        %v431 = vpop.f32.mrb[0].mxu0
        %v432 = vadd.f32 %v215, %v431
        %v433 = vpop.f32.mrb[0].mxu0
        %v434 = vadd.f32 %v219, %v433
        %435 = vmatprep.mubr.bf16.mxu0 0
        %436 = vmatmul.mubr.bf16.gmra.mrb[0].mxu0 %v335
        %v437 = vpop.f32.mrb[0].mxu0
        %v438 = vadd.f32 %v215, %v437
        %v439 = vpop.f32.mrb[0].mxu0
        %v440 = vadd.f32 %v219, %v439
        %v441 = vpop.f32.mrb[0].mxu0
        %v442 = vadd.f32 %v215, %v441
        %v443 = vpop.f32.mrb[0].mxu0
        %v444 = vadd.f32 %v219, %v443
        %445 = vmatprep.mubr.bf16.mxu0 0
        %446 = vmatmul.mubr.bf16.gmra.mrb[0].mxu0 %v338
        %v447 = vpop.f32.mrb[0].mxu0
        %v448 = vadd.f32 %v215, %v447
        %v449 = vpop.f32.mrb[0].mxu0
        %v450 = vadd.f32 %v219, %v449
        %v451 = vpop.f32.mrb[0].mxu0
        %v452 = vadd.f32 %v215, %v451
        %v453 = vpop.f32.mrb[0].mxu0
        %v454 = vadd.f32 %v219, %v453
        %455 = vmatprep.mubr.bf16.mxu0 0
        %456 = vmatmul.mubr.bf16.gmra.mrb[0].mxu0 %v341
        %v457 = vpop.f32.mrb[0].mxu0
        %v458 = vadd.f32 %v215, %v457
        %v459 = vpop.f32.mrb[0].mxu0
        %v460 = vadd.f32 %v219, %v459
        %v461 = vpop.f32.mrb[0].mxu0
        %v462 = vadd.f32 %v215, %v461
        %v463 = vpop.f32.mrb[0].mxu0
        %v464 = vadd.f32 %v219, %v463
        %465 = vmatprep.mubr.bf16.mxu0 0
        %466 = vmatmul.mubr.bf16.gmra.mrb[0].mxu0 %v344
        %v467 = vpop.f32.mrb[0].mxu0
        %v468 = vadd.f32 %v215, %v467
        %v469 = vpop.f32.mrb[0].mxu0
        %v470 = vadd.f32 %v219, %v469
        %v471 = vpop.f32.mrb[0].mxu0
        %v472 = vadd.f32 %v215, %v471
        %v473 = vpop.f32.mrb[0].mxu0
        %v474 = vadd.f32 %v219, %v473
        %475 = vmatprep.mubr.bf16.mxu0 0
        %476 = vmatmul.mubr.bf16.gmra.mrb[0].mxu0 %v347
        %v477 = vpop.f32.mrb[0].mxu0
        %v478 = vadd.f32 %v215, %v477
        %v479 = vpop.f32.mrb[0].mxu0
        %v480 = vadd.f32 %v219, %v479
        %v481 = vpop.f32.mrb[0].mxu0
        %v482 = vadd.f32 %v215, %v481
        %v483 = vpop.f32.mrb[0].mxu0
        %v484 = vadd.f32 %v219, %v483
        %485 = vmatprep.mubr.bf16.mxu0 0
        %486 = vmatmul.mubr.bf16.gmra.mrb[0].mxu0 %v350
        %v487 = vpop.f32.mrb[0].mxu0
        %v488 = vadd.f32 %v215, %v487
        %v489 = vpop.f32.mrb[0].mxu0
        %v490 = vadd.f32 %v219, %v489
        %v491 = vpop.f32.mrb[0].mxu0
        %v492 = vadd.f32 %v215, %v491
        %v493 = vpop.f32.mrb[0].mxu0
        %v494 = vadd.f32 %v219, %v493
        %495 = vmatprep.mubr.bf16.mxu0 0
        %496 = vmatmul.mubr.bf16.gmra.mrb[0].mxu0 %v353
        %v497 = vpop.f32.mrb[0].mxu0
        %v498 = vadd.f32 %v215, %v497
        %v499 = vpop.f32.mrb[0].mxu0
        %v500 = vadd.f32 %v219, %v499
        %v501 = vpop.f32.mrb[0].mxu0
        %v502 = vadd.f32 %v215, %v501
        %v503 = vpop.f32.mrb[0].mxu0
        %v504 = vadd.f32 %v219, %v503
        %505 = vmatprep.mubr.bf16.mxu0 0
        %506 = vmatmul.mubr.bf16.gmra.mrb[0].mxu0 %v356
        %v507 = vpop.f32.mrb[0].mxu0
        %v508 = vadd.f32 %v215, %v507
        %v509 = vpop.f32.mrb[0].mxu0
        %v510 = vadd.f32 %v219, %v509
        %v511 = vpop.f32.mrb[0].mxu0
        %v512 = vadd.f32 %v215, %v511
        %v513 = vpop.f32.mrb[0].mxu0
        %v514 = vadd.f32 %v219, %v513
        %515 = vmatprep.mubr.bf16.mxu0 0
        %516 = vmatmul.mubr.bf16.gmra.mrb[0].mxu0 %v359
        %v517 = vpop.f32.mrb[0].mxu0
        %v518 = vadd.f32 %v215, %v517
        %v519 = vpop.f32.mrb[0].mxu0
        %v520 = vadd.f32 %v219, %v519
        %v521 = vpop.f32.mrb[0].mxu0
        %v522 = vadd.f32 %v215, %v521
        %v523 = vpop.f32.mrb[0].mxu0
        %v524 = vadd.f32 %v219, %v523
        %525 = vmatprep.mubr.bf16.mxu0 0
        %526 = vmatmul.mubr.bf16.gmra.mrb[0].mxu0 %v362
        %v527 = vpop.f32.mrb[0].mxu0
        %v528 = vadd.f32 %v215, %v527
        %v529 = vpop.f32.mrb[0].mxu0
        %v530 = vadd.f32 %v219, %v529
        %v531 = vpop.f32.mrb[0].mxu0
        %v532 = vadd.f32 %v215, %v531
        %v533 = vpop.f32.mrb[0].mxu0
        %v534 = vadd.f32 %v219, %v533
        %535 = vmatprep.mubr.bf16.mxu0 0
        %536 = vmatmul.mubr.bf16.gmra.mrb[0].mxu0 %v365
        %v537 = vpop.f32.mrb[0].mxu0
        %v538 = vadd.f32 %v215, %v537
        %v539 = vpop.f32.mrb[0].mxu0
        %v540 = vadd.f32 %v219, %v539
        %v541 = vpop.f32.mrb[0].mxu0
        %v542 = vadd.f32 %v215, %v541
        %v543 = vpop.f32.mrb[0].mxu0
        %v544 = vadd.f32 %v219, %v543
        %545 = vmatprep.mubr.bf16.mxu0 0
        %546 = vmatmul.mubr.bf16.gmra.mrb[0].mxu0 %v368
        %v547 = vpop.f32.mrb[0].mxu0
        %v548 = vadd.f32 %v215, %v547
        %v549 = vpop.f32.mrb[0].mxu0
        %v550 = vadd.f32 %v219, %v549
        %v551 = vpop.f32.mrb[0].mxu0
        %v552 = vadd.f32 %v215, %v551
        %v553 = vpop.f32.mrb[0].mxu0
        %v554 = vadd.f32 %v219, %v553
        %555 = vmatprep.mubr.bf16.mxu0 0
        %556 = vmatmul.mubr.bf16.gmra.mrb[0].mxu0 %v371
        %v557 = vpop.f32.mrb[0].mxu0
        %v558 = vadd.f32 %v215, %v557
        %v559 = vpop.f32.mrb[0].mxu0
        %v560 = vadd.f32 %v219, %v559
        %v561 = vpop.f32.mrb[0].mxu0
        %v562 = vadd.f32 %v215, %v561
        %v563 = vpop.f32.mrb[0].mxu0
        %v564 = vadd.f32 %v219, %v563
        %565 = vmatprep.mubr.bf16.mxu0 0
        %566 = vmatmul.mubr.bf16.gmra.mrb[0].mxu0 %v374
        %v567 = vpop.f32.mrb[0].mxu0
        %v568 = vadd.f32 %v215, %v567
        %v569 = vpop.f32.mrb[0].mxu0
        %v570 = vadd.f32 %v219, %v569
        %v571 = vpop.f32.mrb[0].mxu0
        %v572 = vadd.f32 %v215, %v571
        %v573 = vpop.f32.mrb[0].mxu0
        %v574 = vadd.f32 %v219, %v573
        %575 = vdwg.mxu0
        %v576 = vmax.f32 %v418, %v420
        %v577 = vmax.f32 %v422, %v424
        %v578 = vmax.f32 %v428, %v430
        %v579 = vmax.f32 %v432, %v434
        %v580 = vmax.f32 %v438, %v440
        %v581 = vmax.f32 %v442, %v444
        %v582 = vmax.f32 %v448, %v450
        %v583 = vmax.f32 %v452, %v454
        %v584 = vmax.f32 %v458, %v460
        %v585 = vmax.f32 %v462, %v464
        %v586 = vmax.f32 %v468, %v470
        %v587 = vmax.f32 %v472, %v474
        %v588 = vmax.f32 %v478, %v480
        %v589 = vmax.f32 %v482, %v484
        %v590 = vmax.f32 %v488, %v490
        %v591 = vmax.f32 %v492, %v494
        %v592 = vmax.f32 %v498, %v500
        %v593 = vmax.f32 %v502, %v504
        %v594 = vmax.f32 %v508, %v510
        %v595 = vmax.f32 %v512, %v514
        %v596 = vmax.f32 %v518, %v520
        %v597 = vmax.f32 %v522, %v524
        %v598 = vmax.f32 %v528, %v530
        %v599 = vmax.f32 %v532, %v534
        %v600 = vmax.f32 %v538, %v540
        %v601 = vmax.f32 %v542, %v544
        %v602 = vmax.f32 %v548, %v550
        %v603 = vmax.f32 %v552, %v554
        %v604 = vmax.f32 %v558, %v560
        %v605 = vmax.f32 %v562, %v564
        %v606 = vmax.f32 %v568, %v570
        %v607 = vmax.f32 %v572, %v574
        %608 = vst [vmem:[%s164] sm:$0xff] %v576
        %609 = vst [vmem:[%s164 + $0x8] sm:$0xff] %v577
        %610 = vst [vmem:[%s164 + $0x10] sm:$0xff] %v578
        %611 = vst [vmem:[%s164 + $0x18] sm:$0xff] %v579
        %612 = vst [vmem:[%s164 + $0x20] sm:$0xff] %v580
        %613 = vst [vmem:[%s164 + $0x28] sm:$0xff] %v581
        %614 = vst [vmem:[%s164 + $0x30] sm:$0xff] %v582
        %615 = vst [vmem:[%s164 + $0x38] sm:$0xff] %v583
        %616 = vst [vmem:[%s164 + $0x40] sm:$0xff] %v584
        %617 = vst [vmem:[%s164 + $0x48] sm:$0xff] %v585
        %618 = vst [vmem:[%s164 + $0x50] sm:$0xff] %v586
        %619 = vst [vmem:[%s164 + $0x58] sm:$0xff] %v587
        %620 = vst [vmem:[%s164 + $0x60] sm:$0xff] %v588
        %621 = vst [vmem:[%s164 + $0x68] sm:$0xff] %v589
        %622 = vst [vmem:[%s164 + $0x70] sm:$0xff] %v590
        %623 = vst [vmem:[%s164 + $0x78] sm:$0xff] %v591
        %624 = vst [vmem:[%s164 + $0x80] sm:$0xff] %v592
        %625 = vst [vmem:[%s164 + $0x88] sm:$0xff] %v593
        %626 = vst [vmem:[%s164 + $0x90] sm:$0xff] %v594
        %627 = vst [vmem:[%s164 + $0x98] sm:$0xff] %v595
        %628 = vst [vmem:[%s164 + $0xa0] sm:$0xff] %v596
        %629 = vst [vmem:[%s164 + $0xa8] sm:$0xff] %v597
        %630 = vst [vmem:[%s164 + $0xb0] sm:$0xff] %v598
        %631 = vst [vmem:[%s164 + $0xb8] sm:$0xff] %v599
        %632 = vst [vmem:[%s164 + $0xc0] sm:$0xff] %v600
        %633 = vst [vmem:[%s164 + $0xc8] sm:$0xff] %v601
        %634 = vst [vmem:[%s164 + $0xd0] sm:$0xff] %v602
        %635 = vst [vmem:[%s164 + $0xd8] sm:$0xff] %v603
        %636 = vst [vmem:[%s164 + $0xe0] sm:$0xff] %v604
        %637 = vst [vmem:[%s164 + $0xe8] sm:$0xff] %v605
        %638 = vst [vmem:[%s164 + $0xf0] sm:$0xff] %v606
        %639 = vst [vmem:[%s164 + $0xf8] sm:$0xff] %v607
        %s640 = sand.u32 %s93, 1
        %s641 = scalar_lea.sflag [#allocation3], %s640
        %s642 = sand.u32 %s93, 1
        %s643 = smul.addr %s642, 256
        %s644 = scalar_lea.vmem [#allocation2], %s643
        // Predicated region
        $region33: #{tpu_custom_call.1} parent=31 // pred_check
          %p645 = pneg %p103
        $region34: #{tpu_custom_call.1} parent=31 // pred_check_branch
          %647 = sbr.rel (%p645) target = $region36
        $region35: #{tpu_custom_call.1} parent=31 // pred_region
          %s648 = smul.u32 32, %s17
          %s650 = ssub.s32 4096, 4096
          %651 = vsyncadd %s641, %s650
          %s652 = smul.addr %s648, 128
          %s653 = scalar_lea.hbm %s3, %s652
          %s654 = sshll.u32 %s644, 4
          %s655 = int_to_ptr.vmem [resolvable:$true] %s654
          %660 = dma.vmem_to_hbm [thread:$0]  %s655, 4096, %s653, %s641, 128, 128, 8
        $region36: #{tpu_custom_call.1} parent=31 // pred_fallthru
          _
      $region32: #{tpu_custom_call.1} parent=5 // pred_fallthru
        _
      %p661 = scmp.le.s32.totalorder 2, %s12
      // Predicated region
      $region37: #{tpu_custom_call.1} parent=5 // pred_check
        %p662 = pneg %p661
      $region38: #{tpu_custom_call.1} parent=5 // pred_check_branch
        %664 = sbr.rel (%p662) target = $region40
      $region39: #{tpu_custom_call.1} parent=5 // pred_region
        %s665 = ssub.s32 %s12, 2
        // Predicated region
        $region41: #{tpu_custom_call.1} parent=39 // pred_check
          %p666 = pneg %p109
        $region42: #{tpu_custom_call.1} parent=39 // pred_check_branch
          %668 = sbr.rel (%p666) target = $region44
        $region43: #{tpu_custom_call.1} parent=39 // pred_region
          %s669 = sand.u32 %s94, 1
          %s670 = scalar_lea.sflag [#allocation3], %s669
          %s671 = sand.u32 %s94, 1
          %s672 = smul.addr %s671, 256
          %s673 = scalar_lea.vmem [#allocation2], %s672
          %674 = dma.done %s670, 4096
        $region44: #{tpu_custom_call.1} parent=39 // pred_fallthru
          _
      $region40: #{tpu_custom_call.1} parent=5 // pred_fallthru
        _
    $region6: #{tpu_custom_call.1} parent=1 // loop_footer
      %s16 = sadd.s32 1, %s12
    $region7: #{tpu_custom_call.1} parent=1 // loop_footer_branch
      %11 = sbr.rel target = $region3
    $region8: #{tpu_custom_call.1} parent=1 // loop_exit
      _
    %675 = vsyncpa [#allocation3], 1
    %s676 = scalar_lea.sflag [#allocation3], 1
    %677 = vsyncpa %s676, 1

</llo_original>
